<compile_context>
chip_gen: v6e
topology: v6e:2x2x1
jax: 0.10.0
libtpu: 0.0.40
codegen_flags: <defaults>
</compile_context>

<pallas_src>
import jax
import jax.numpy as jnp
from jax.experimental import pallas as pl
from jax.experimental.pallas import tpu as pltpu

OUT_DIM = 3      # logical output width of l3 (matches nn.Linear(hidden, 3))
OUT_PAD = 128    # lane-dense padded width used only for the in-VMEM l3 matmul


def mlp_kernel(x_ref, w1_ref, b1_ref, w2_ref, b2_ref, w3_ref, b3_ref, o_ref):
    # Layer 1: bf16 MXU matmul, f32 accumulate; bias + ReLU in f32 on the VPU.
    h1 = jnp.dot(x_ref[...], w1_ref[...], preferred_element_type=jnp.float32)
    h1 = jnp.maximum(h1 + b1_ref[...], 0.0)
    # Layer 2
    h2 = jnp.dot(h1.astype(w2_ref.dtype), w2_ref[...],
                 preferred_element_type=jnp.float32)
    h2 = jnp.maximum(h2 + b2_ref[...], 0.0)
    # Layer 3 (no activation): lane-dense 128-wide matmul on the MXU, then
    # store only the logical 3 columns -> output HBM writeback is 12 B/row
    # instead of 512 B/row, and no wrapper-side slice pass is needed.
    out = jnp.dot(h2.astype(w3_ref.dtype), w3_ref[...],
                  preferred_element_type=jnp.float32)
    out = out + b3_ref[...]
    o_ref[...] = out[:, :OUT_DIM].astype(o_ref.dtype)


def _pick_batch_tile(B, tb_max=512):
    """Batch tile: multiple of 8 (or == B), <= tb_max; for larger batches aim
    for >= 4 grid steps so v7x's two TensorCores each see >= 2 tiles."""
    if B <= 64:
        return B                              # single exact tile (block == array dim)
    tb = min(tb_max, pl.cdiv(B, 4))           # target ~4+ tiles
    tb = pl.cdiv(tb, 8) * 8                   # round up to a multiple of 8
    return max(8, min(tb, tb_max))


def net_forward(x, params, *, tb=512):
    """Gridded MLP forward: batch tiled/pipelined, weights VMEM-resident."""
    w1, b1, w2, b2, w3p, b3p = params
    B, in_dim = x.shape
    hidden = w1.shape[1]

    # Guarantee the single-pass bf16 MXU path regardless of caller dtype.
    x = x.astype(jnp.bfloat16)

    tb = _pick_batch_tile(B, tb)
    grid = (pl.cdiv(B, tb),)                  # ragged last tile handled by Pallas

    # Weight/bias blocks never change -> DMA'd once, stay resident in VMEM.
    resident = lambda shape: pl.BlockSpec(shape, lambda i: (0, 0))

    weight_bytes = sum(int(a.size) * a.dtype.itemsize
                       for a in (w1, b1, w2, b2, w3p, b3p))
    cost = pl.CostEstimate(
        flops=2 * B * (in_dim * hidden + hidden * hidden + hidden * OUT_PAD),
        transcendentals=0,
        bytes_accessed=B * in_dim * 2 + B * OUT_DIM * 4 + weight_bytes)

    out = pl.pallas_call(
        mlp_kernel,
        out_shape=jax.ShapeDtypeStruct((B, OUT_DIM), jnp.float32),
        grid=grid,
        in_specs=[
            pl.BlockSpec((tb, in_dim), lambda i: (i, 0)),   # x: tiled over batch
            resident(w1.shape), resident(b1.shape),
            resident(w2.shape), resident(b2.shape),
            resident(w3p.shape), resident(b3p.shape),
        ],
        out_specs=pl.BlockSpec((tb, OUT_DIM), lambda i: (i, 0)),
        compiler_params=pltpu.CompilerParams(
            dimension_semantics=("parallel",)),   # shards batch across TCs (v7x)
        cost_estimate=cost,
    )(x, w1, b1, w2, b2, w3p, b3p)

    return out


def init_params(key, input_dim, hidden, out_dim=OUT_DIM):
    """nn.Linear-style U(-1/sqrt(fan_in), 1/sqrt(fan_in)) init.
    Weights stored pre-transposed [in, out], cast to bf16 (MXU operands);
    biases f32, shape [1, out]. The l3 weight/bias are zero-padded to 128
    output columns HERE (once), so no per-forward padding ops are emitted."""
    ks = jax.random.split(key, 6)

    def linear(kw, kb, fan_in, fan_out):
        bound = 1.0 / jnp.sqrt(jnp.float32(fan_in))
        w = jax.random.uniform(kw, (fan_in, fan_out), jnp.float32, -bound, bound)
        b = jax.random.uniform(kb, (1, fan_out), jnp.float32, -bound, bound)
        return w.astype(jnp.bfloat16), b

    w1, b1 = linear(ks[0], ks[1], input_dim, hidden)
    w2, b2 = linear(ks[2], ks[3], hidden, hidden)
    w3, b3 = linear(ks[4], ks[5], hidden, out_dim)

    w3p = jnp.zeros((hidden, OUT_PAD), w3.dtype).at[:, :out_dim].set(w3)
    b3p = jnp.zeros((1, OUT_PAD), b3.dtype).at[:, :out_dim].set(b3)
    return (w1, b1, w2, b2, w3p, b3p)


def reference_forward(x, params):
    """Pure-XLA reference using the same bf16 operands + f32 accumulation."""
    w1, b1, w2, b2, w3p, b3p = params
    x = x.astype(jnp.bfloat16)
    h1 = jnp.maximum(
        jnp.dot(x, w1, preferred_element_type=jnp.float32) + b1, 0.0)
    h2 = jnp.maximum(
        jnp.dot(h1.astype(w2.dtype), w2, preferred_element_type=jnp.float32) + b2,
        0.0)
    return (jnp.dot(h2.astype(w3p.dtype), w3p[:, :OUT_DIM],
                    preferred_element_type=jnp.float32) + b3p[:, :OUT_DIM])


if __name__ == "__main__":
    batch, input_dim, hidden = 8, 16, 32

    key = jax.random.PRNGKey(0)
    kx, kp = jax.random.split(key)
    x = jax.random.normal(kx, (batch, input_dim), jnp.float32)
    params = init_params(kp, input_dim, hidden)

    out = net_forward(x, params)
    jax.block_until_ready(out)

    ref = reference_forward(x, params)
    assert out.shape == (batch, OUT_DIM)
    assert jnp.allclose(out, ref, atol=1e-3, rtol=1e-3), (
        f"max abs err = {jnp.max(jnp.abs(out - ref))}")

    print("KERNEL_OK")
</pallas_src>

<mosaic_0001>
module attributes {stable_mosaic.version = 11 : i64} {
  func.func @mlp_kernel(%arg0: i32, %arg1: memref<8x16xbf16, #tpu.memory_space<vmem>>, %arg2: memref<16x32xbf16, #tpu.memory_space<vmem>>, %arg3: memref<1x32xf32, #tpu.memory_space<vmem>>, %arg4: memref<32x32xbf16, #tpu.memory_space<vmem>>, %arg5: memref<1x32xf32, #tpu.memory_space<vmem>>, %arg6: memref<32x128xbf16, #tpu.memory_space<vmem>>, %arg7: memref<1x128xf32, #tpu.memory_space<vmem>>, %arg8: memref<8x3xf32, #tpu.memory_space<vmem>>) attributes {dimension_semantics = [#tpu.dimension_semantics<parallel>], iteration_bounds = array<i64: 1>, scalar_prefetch = 0 : i64, scratch_operands = 0 : i64, tpu.core_type = #tpu.core_type<tc>, window_params = [{transform_indices = @transform_0, window_bounds = array<i64: 8, 16>}, {pipeline_mode = #tpu.pipeline_mode<synchronous>, transform_indices = @transform_1, window_bounds = array<i64: 16, 32>}, {pipeline_mode = #tpu.pipeline_mode<synchronous>, transform_indices = @transform_2, window_bounds = array<i64: 1, 32>}, {pipeline_mode = #tpu.pipeline_mode<synchronous>, transform_indices = @transform_3, window_bounds = array<i64: 32, 32>}, {pipeline_mode = #tpu.pipeline_mode<synchronous>, transform_indices = @transform_4, window_bounds = array<i64: 1, 32>}, {pipeline_mode = #tpu.pipeline_mode<synchronous>, transform_indices = @transform_5, window_bounds = array<i64: 32, 128>}, {pipeline_mode = #tpu.pipeline_mode<synchronous>, transform_indices = @transform_6, window_bounds = array<i64: 1, 128>}, {transform_indices = @transform_7, window_bounds = array<i64: 8, 3>}]} {
    %c0 = arith.constant 0 : index
    %c0_0 = arith.constant 0 : index
    %0 = vector.load %arg1[%c0, %c0_0] : memref<8x16xbf16, #tpu.memory_space<vmem>>, vector<8x16xbf16>
    %c0_1 = arith.constant 0 : index
    %c0_2 = arith.constant 0 : index
    %1 = vector.load %arg2[%c0_1, %c0_2] : memref<16x32xbf16, #tpu.memory_space<vmem>>, vector<16x32xbf16>
    %cst = arith.constant dense<0.000000e+00> : vector<8x32xf32>
    %2 = tpu.matmul %0, %1, %cst {dimension_numbers = #tpu.dot_dimension_numbers<[1], [0], [0], [1], [0, 0, 1, 1], [], []>} : vector<8x16xbf16>, vector<16x32xbf16>, vector<8x32xf32> -> vector<8x32xf32>
    %c0_3 = arith.constant 0 : index
    %c0_4 = arith.constant 0 : index
    %3 = vector.load %arg3[%c0_3, %c0_4] : memref<1x32xf32, #tpu.memory_space<vmem>>, vector<1x32xf32>
    %4 = vector.broadcast %3 : vector<1x32xf32> to vector<8x32xf32>
    %5 = arith.addf %2, %4 : vector<8x32xf32>
    %cst_5 = arith.constant 0.000000e+00 : f32
    %6 = vector.broadcast %cst_5 : f32 to vector<8x32xf32>
    %7 = arith.maximumf %5, %6 : vector<8x32xf32>
    %8 = arith.truncf %7 : vector<8x32xf32> to vector<8x32xbf16>
    %c0_6 = arith.constant 0 : index
    %c0_7 = arith.constant 0 : index
    %9 = vector.load %arg4[%c0_6, %c0_7] : memref<32x32xbf16, #tpu.memory_space<vmem>>, vector<32x32xbf16>
    %cst_8 = arith.constant dense<0.000000e+00> : vector<8x32xf32>
    %10 = tpu.matmul %8, %9, %cst_8 {dimension_numbers = #tpu.dot_dimension_numbers<[1], [0], [0], [1], [0, 0, 1, 1], [], []>} : vector<8x32xbf16>, vector<32x32xbf16>, vector<8x32xf32> -> vector<8x32xf32>
    %c0_9 = arith.constant 0 : index
    %c0_10 = arith.constant 0 : index
    %11 = vector.load %arg5[%c0_9, %c0_10] : memref<1x32xf32, #tpu.memory_space<vmem>>, vector<1x32xf32>
    %12 = vector.broadcast %11 : vector<1x32xf32> to vector<8x32xf32>
    %13 = arith.addf %10, %12 : vector<8x32xf32>
    %cst_11 = arith.constant 0.000000e+00 : f32
    %14 = vector.broadcast %cst_11 : f32 to vector<8x32xf32>
    %15 = arith.maximumf %13, %14 : vector<8x32xf32>
    %16 = arith.truncf %15 : vector<8x32xf32> to vector<8x32xbf16>
    %c0_12 = arith.constant 0 : index
    %c0_13 = arith.constant 0 : index
    %17 = vector.load %arg6[%c0_12, %c0_13] : memref<32x128xbf16, #tpu.memory_space<vmem>>, vector<32x128xbf16>
    %cst_14 = arith.constant dense<0.000000e+00> : vector<8x128xf32>
    %18 = tpu.matmul %16, %17, %cst_14 {dimension_numbers = #tpu.dot_dimension_numbers<[1], [0], [0], [1], [0, 0, 1, 1], [], []>} : vector<8x32xbf16>, vector<32x128xbf16>, vector<8x128xf32> -> vector<8x128xf32>
    %c0_15 = arith.constant 0 : index
    %c0_16 = arith.constant 0 : index
    %19 = vector.load %arg7[%c0_15, %c0_16] : memref<1x128xf32, #tpu.memory_space<vmem>>, vector<1x128xf32>
    %20 = vector.broadcast %19 : vector<1x128xf32> to vector<8x128xf32>
    %21 = arith.addf %18, %20 : vector<8x128xf32>
    %22 = vector.extract_strided_slice %21 {offsets = [0, 0], sizes = [8, 3], strides = [1, 1]} : vector<8x128xf32> to vector<8x3xf32>
    %c0_17 = arith.constant 0 : index
    %c0_18 = arith.constant 0 : index
    %23 = vector.load %arg8[%c0_17, %c0_18] : memref<8x3xf32, #tpu.memory_space<vmem>>, vector<8x3xf32>
    tpu.vector_store %arg8[%c0_17, %c0_18], %22 {strides = array<i32>} : memref<8x3xf32, #tpu.memory_space<vmem>>, vector<8x3xf32>,
    return
  }
  func.func @transform_0(%arg0: i32) -> (i32, i32) {
    %c0_i32 = arith.constant 0 : i32
    %c0_i32_0 = arith.constant 0 : i32
    return %arg0, %c0_i32 : i32, i32
  }
  func.func @transform_1(%arg0: i32) -> (i32, i32) {
    %c0_i32 = arith.constant 0 : i32
    %c0_i32_0 = arith.constant 0 : i32
    %c0_i32_1 = arith.constant 0 : i32
    return %c0_i32, %c0_i32_0 : i32, i32
  }
  func.func @transform_2(%arg0: i32) -> (i32, i32) {
    %c0_i32 = arith.constant 0 : i32
    %c0_i32_0 = arith.constant 0 : i32
    %c0_i32_1 = arith.constant 0 : i32
    return %c0_i32, %c0_i32_0 : i32, i32
  }
  func.func @transform_3(%arg0: i32) -> (i32, i32) {
    %c0_i32 = arith.constant 0 : i32
    %c0_i32_0 = arith.constant 0 : i32
    %c0_i32_1 = arith.constant 0 : i32
    return %c0_i32, %c0_i32_0 : i32, i32
  }
  func.func @transform_4(%arg0: i32) -> (i32, i32) {
    %c0_i32 = arith.constant 0 : i32
    %c0_i32_0 = arith.constant 0 : i32
    %c0_i32_1 = arith.constant 0 : i32
    return %c0_i32, %c0_i32_0 : i32, i32
  }
  func.func @transform_5(%arg0: i32) -> (i32, i32) {
    %c0_i32 = arith.constant 0 : i32
    %c0_i32_0 = arith.constant 0 : i32
    %c0_i32_1 = arith.constant 0 : i32
    return %c0_i32, %c0_i32_0 : i32, i32
  }
  func.func @transform_6(%arg0: i32) -> (i32, i32) {
    %c0_i32 = arith.constant 0 : i32
    %c0_i32_0 = arith.constant 0 : i32
    %c0_i32_1 = arith.constant 0 : i32
    return %c0_i32, %c0_i32_0 : i32, i32
  }
  func.func @transform_7(%arg0: i32) -> (i32, i32) {
    %c0_i32 = arith.constant 0 : i32
    %c0_i32_0 = arith.constant 0 : i32
    return %arg0, %c0_i32 : i32, i32
  }
}

</mosaic_0001>

<llo_original>
// kernel: tpu_custom_call.1
$region0: #{tpu_custom_call.1}
  #allocation0 [shape = 'u32[]', space=smem, size = 0x4, offset = 0x4, fixed_abs, tag = 'smem constant byte address 0x4 - core index']
  #allocation1 [shape = 'u32[144,128]{1,0:T(1,128)}', space=vmem, size = 0x12000, scoped, tag = 'internal scratch']
  %s0 = inlined_call_operand.hbm [shape: bf16[8,16], index: 0, kind: input, shape index: {}]
  %s1 = inlined_call_operand.hbm [shape: bf16[16,32], index: 1, kind: input, shape index: {}]
  %s2 = inlined_call_operand.vmem [shape: f32[1,32], index: 2, kind: input, shape index: {}]
  %s3 = inlined_call_operand.hbm [shape: bf16[32,32], index: 3, kind: input, shape index: {}]
  %s4 = inlined_call_operand.vmem [shape: f32[1,32], index: 4, kind: input, shape index: {}]
  %s5 = inlined_call_operand.hbm [shape: bf16[32,128], index: 5, kind: input, shape index: {}]
  %s6 = inlined_call_operand.vmem [shape: f32[1,128], index: 6, kind: input, shape index: {}]
  %s7 = inlined_call_operand.vmem [shape: f32[8,3], index: 7, kind: output, shape index: {}]
  %s8 = sld [smem:[#allocation0]]
  $region54: #{tpu_custom_call.1} parent=0
    _
  %s10 = ssub.s32 1, %s8
  %s11 = scalar_select 0, %s10, %s8
  $region1: #{tpu_custom_call.1} parent=0
    #allocation2 [shape = 'u8[2048]{0}', space=vmem, size = 0x800, scoped, tag = 'input window, operand 0, single buffered']
    #allocation3 [shape = 's32[1]{0}', space=sflag, size = 0x4, scoped, tag = 'scoped memory for tpu_custom_call.1']
    #allocation4 [shape = 'u8[4096]{0}', space=vmem, size = 0x1000, scoped, tag = 'input window, operand 1, single buffered']
    #allocation5 [shape = 's32[1]{0}', space=sflag, size = 0x4, scoped, tag = 'scoped memory for tpu_custom_call.1']
    #allocation6 [shape = 'u8[8192]{0}', space=vmem, size = 0x2000, scoped, tag = 'input window, operand 3, single buffered']
    #allocation7 [shape = 'u8[8192]{0}', space=vmem, size = 0x2000, scoped, tag = 'input window, operand 5, single buffered']
    #allocation8 [shape = 's32[1]{0}', space=sflag, size = 0x4, scoped, tag = 'scoped memory for tpu_custom_call.1']
    %12 = vsyncpa [#allocation3], 0
    %13 = vsyncpa [#allocation5], 0
    %14 = vsyncpa [#allocation8], 0
    // Predicated region
    $region2: #{tpu_custom_call.1} parent=1 // pred_check
      _
    $region3: #{tpu_custom_call.1} parent=1 // pred_check_branch
      %16 = sbr.rel (0) target = $region5
    $region4: #{tpu_custom_call.1} parent=1 // pred_region
      %s18 = ssub.s32 64, 64
      %19 = vsyncadd [#allocation3], %s18
      %s21 = sshll.u32 [#allocation2], 4
      %s22 = int_to_ptr.vmem [resolvable:$true] %s21
      %24 = dma.hbm_to_vmem [thread:$0]  %s0, 64, %s22, [#allocation3]
    $region5: #{tpu_custom_call.1} parent=1 // pred_fallthru
      _
    // Predicated region
    $region6: #{tpu_custom_call.1} parent=1 // pred_check
      _
    $region7: #{tpu_custom_call.1} parent=1 // pred_check_branch
      %26 = sbr.rel (0) target = $region9
    $region8: #{tpu_custom_call.1} parent=1 // pred_region
      %s28 = ssub.s32 128, 128
      %29 = vsyncadd [#allocation5], %s28
      %s30 = sshll.u32 [#allocation4], 4
      %s31 = int_to_ptr.vmem [resolvable:$true] %s30
      %36 = dma.hbm_to_vmem [thread:$0]  %s1, 128, %s31, [#allocation5], 64, 64, 4
    $region9: #{tpu_custom_call.1} parent=1 // pred_fallthru
      _
    // Predicated region
    $region10: #{tpu_custom_call.1} parent=1 // pred_check
      _
    $region11: #{tpu_custom_call.1} parent=1 // pred_check_branch
      %38 = sbr.rel (0) target = $region13
    $region12: #{tpu_custom_call.1} parent=1 // pred_region
      _
    $region13: #{tpu_custom_call.1} parent=1 // pred_fallthru
      _
    // Predicated region
    $region14: #{tpu_custom_call.1} parent=1 // pred_check
      _
    $region15: #{tpu_custom_call.1} parent=1 // pred_check_branch
      %40 = sbr.rel (0) target = $region17
    $region16: #{tpu_custom_call.1} parent=1 // pred_region
      %s42 = ssub.s32 256, 256
      %43 = vsyncadd [#allocation5], %s42
      %s44 = sshll.u32 [#allocation6], 4
      %s45 = int_to_ptr.vmem [resolvable:$true] %s44
      %50 = dma.hbm_to_vmem [thread:$0]  %s3, 256, %s45, [#allocation5], 64, 64, 4
    $region17: #{tpu_custom_call.1} parent=1 // pred_fallthru
      _
    // Predicated region
    $region18: #{tpu_custom_call.1} parent=1 // pred_check
      _
    $region19: #{tpu_custom_call.1} parent=1 // pred_check_branch
      %52 = sbr.rel (0) target = $region21
    $region20: #{tpu_custom_call.1} parent=1 // pred_region
      _
    $region21: #{tpu_custom_call.1} parent=1 // pred_fallthru
      _
    // Predicated region
    $region22: #{tpu_custom_call.1} parent=1 // pred_check
      _
    $region23: #{tpu_custom_call.1} parent=1 // pred_check_branch
      %54 = sbr.rel (0) target = $region25
    $region24: #{tpu_custom_call.1} parent=1 // pred_region
      %s56 = ssub.s32 256, 256
      %57 = vsyncadd [#allocation8], %s56
      %s58 = sshll.u32 [#allocation7], 4
      %s59 = int_to_ptr.vmem [resolvable:$true] %s58
      %64 = dma.hbm_to_vmem [thread:$0]  %s5, 256, %s59, [#allocation8], 64, 64, 4
    $region25: #{tpu_custom_call.1} parent=1 // pred_fallthru
      _
    // Predicated region
    $region26: #{tpu_custom_call.1} parent=1 // pred_check
      _
    $region27: #{tpu_custom_call.1} parent=1 // pred_check_branch
      %66 = sbr.rel (0) target = $region29
    $region28: #{tpu_custom_call.1} parent=1 // pred_region
      _
    $region29: #{tpu_custom_call.1} parent=1 // pred_fallthru
      _
    // Predicated region
    $region30: #{tpu_custom_call.1} parent=1 // pred_check
      _
    $region31: #{tpu_custom_call.1} parent=1 // pred_check_branch
      %68 = sbr.rel (0) target = $region33
    $region32: #{tpu_custom_call.1} parent=1 // pred_region
      %69 = dma.done [#allocation3], 64
    $region33: #{tpu_custom_call.1} parent=1 // pred_fallthru
      _
    // Predicated region
    $region34: #{tpu_custom_call.1} parent=1 // pred_check
      _
    $region35: #{tpu_custom_call.1} parent=1 // pred_check_branch
      %71 = sbr.rel (0) target = $region37
    $region36: #{tpu_custom_call.1} parent=1 // pred_region
      %72 = dma.done [#allocation5], 128
    $region37: #{tpu_custom_call.1} parent=1 // pred_fallthru
      _
    // Predicated region
    $region38: #{tpu_custom_call.1} parent=1 // pred_check
      _
    $region39: #{tpu_custom_call.1} parent=1 // pred_check_branch
      %74 = sbr.rel (0) target = $region41
    $region40: #{tpu_custom_call.1} parent=1 // pred_region
      %75 = dma.done [#allocation5], 256
    $region41: #{tpu_custom_call.1} parent=1 // pred_fallthru
      _
    // Predicated region
    $region42: #{tpu_custom_call.1} parent=1 // pred_check
      _
    $region43: #{tpu_custom_call.1} parent=1 // pred_check_branch
      %77 = sbr.rel (0) target = $region45
    $region44: #{tpu_custom_call.1} parent=1 // pred_region
      %78 = dma.done [#allocation8], 256
    $region45: #{tpu_custom_call.1} parent=1 // pred_fallthru
      _
    %v80 = vld [vmem:[#allocation2] sm:$0xf]
    %v81 = vld [vmem:[#allocation4] sm:$0xf]
    %v82 = vld [vmem:[#allocation4 + $0x4] sm:$0xf]
    %v83 = vld [vmem:[%s2] sm:$0x1]
    %v85 = vlaneseq
    %v86 = vshrl.u32 %v85, 7
    %v87 = vsub.s32 0, %v86
    %v88 = vrot.slane %v83, %v87
    %v92 = vunpack.c.l.b16 %v81
    %v93 = vunpack.c.l.b16 %v82
    %v94 = vpack.c.b16 %v93, %v92
    %vm96 = vcmask 130048
    %v98 = vsel %vm96, %v80, 0
    %100 = vmatprep.subr.bf16.mxu0 0
    %101 = vmatpush1.bf16.msra.mxu0 0
    %102 = vmatprep.subr.bf16.mxu0 0
    %103 = vmatpush1.bf16.msra.mxu0 0
    %104 = vmatprep.subr.bf16.mxu0 0
    %105 = vmatpush1.bf16.msra.mxu0 0
    %106 = vmatprep.subr.bf16.mxu0 0
    %107 = vmatpush1.bf16.msra.mxu0 0
    %108 = vmatprep.subr.bf16.mxu0 0
    %109 = vmatpush1.bf16.msra.mxu0 0
    %110 = vmatprep.subr.bf16.mxu0 0
    %111 = vmatpush1.bf16.msra.mxu0 0
    %112 = vmatprep.subr.bf16.mxu0 0
    %113 = vmatpush1.bf16.msra.mxu0 0
    %114 = vmatprep.subr.bf16.mxu0 0
    %115 = vmatpush1.bf16.msra.mxu0 %v94
    %116 = vmatprep.subr.bf16.mxu0 0
    %117 = vmatpush2.bf16.msra.mxu0 0
    %118 = vmatprep.subr.bf16.mxu0 0
    %119 = vmatpush2.bf16.msra.mxu0 0
    %120 = vmatprep.subr.bf16.mxu0 0
    %121 = vmatpush2.bf16.msra.mxu0 0
    %122 = vmatprep.subr.bf16.mxu0 0
    %123 = vmatpush2.bf16.msra.mxu0 0
    %124 = vmatprep.subr.bf16.mxu0 0
    %125 = vmatpush2.bf16.msra.mxu0 0
    %126 = vmatprep.subr.bf16.mxu0 0
    %127 = vmatpush2.bf16.msra.mxu0 0
    %128 = vmatprep.subr.bf16.mxu0 0
    %129 = vmatpush2.bf16.msra.mxu0 0
    %130 = vmatprep.subr.bf16.mxu0 0
    %131 = vmatpush2.bf16.msra.mxu0 0
    %132 = vmatprep.mubr.bf16.mxu0 0
    %133 = vmatmul.mubr.bf16.gmra.mxu0 %v98
    %v134 = vpop.f32.mrf.mxu0
    %v135 = vadd.f32 %v88, %v134
    %v136 = vpop.f32.mrf.mxu0
    %v137 = vpop.f32.mrf.mxu0
    %v138 = vpop.f32.mrf.mxu0
    %139 = vdwg.mxu0
    %v140 = vmax.f32 %v135, 0.0
    %v141 = vpack.c.bf16 %v140, %v140
    %v142 = vld [vmem:[#allocation6] sm:$0xf]
    %v143 = vld [vmem:[#allocation6 + $0x4] sm:$0xf]
    %v144 = vld [vmem:[#allocation6 + $0x8] sm:$0xf]
    %v145 = vld [vmem:[#allocation6 + $0xc] sm:$0xf]
    %v146 = vld [vmem:[%s4] sm:$0x1]
    %v148 = vlaneseq
    %v149 = vshrl.u32 %v148, 7
    %v150 = vsub.s32 0, %v149
    %v151 = vrot.slane %v146, %v150
    %v157 = vunpack.c.l.b16 %v142
    %v158 = vunpack.c.l.b16 %v143
    %v159 = vunpack.c.l.b16 %v144
    %v160 = vunpack.c.l.b16 %v145
    %v161 = vpack.c.b16 %v158, %v157
    %v162 = vpack.c.b16 %v160, %v159
    %vm165 = vcmask 261120
    %v167 = vsel %vm165, %v141, 0
    %169 = vmatprep.subr.bf16.mxu0 0
    %170 = vmatpush1.bf16.msra.mxu0 0
    %171 = vmatprep.subr.bf16.mxu0 0
    %172 = vmatpush1.bf16.msra.mxu0 0
    %173 = vmatprep.subr.bf16.mxu0 0
    %174 = vmatpush1.bf16.msra.mxu0 0
    %175 = vmatprep.subr.bf16.mxu0 0
    %176 = vmatpush1.bf16.msra.mxu0 0
    %177 = vmatprep.subr.bf16.mxu0 0
    %178 = vmatpush1.bf16.msra.mxu0 0
    %179 = vmatprep.subr.bf16.mxu0 0
    %180 = vmatpush1.bf16.msra.mxu0 0
    %181 = vmatprep.subr.bf16.mxu0 0
    %182 = vmatpush1.bf16.msra.mxu0 %v162
    %183 = vmatprep.subr.bf16.mxu0 0
    %184 = vmatpush1.bf16.msra.mxu0 %v161
    %185 = vmatprep.subr.bf16.mxu0 0
    %186 = vmatpush2.bf16.msra.mxu0 0
    %187 = vmatprep.subr.bf16.mxu0 0
    %188 = vmatpush2.bf16.msra.mxu0 0
    %189 = vmatprep.subr.bf16.mxu0 0
    %190 = vmatpush2.bf16.msra.mxu0 0
    %191 = vmatprep.subr.bf16.mxu0 0
    %192 = vmatpush2.bf16.msra.mxu0 0
    %193 = vmatprep.subr.bf16.mxu0 0
    %194 = vmatpush2.bf16.msra.mxu0 0
    %195 = vmatprep.subr.bf16.mxu0 0
    %196 = vmatpush2.bf16.msra.mxu0 0
    %197 = vmatprep.subr.bf16.mxu0 0
    %198 = vmatpush2.bf16.msra.mxu0 0
    %199 = vmatprep.subr.bf16.mxu0 0
    %200 = vmatpush2.bf16.msra.mxu0 0
    %201 = vmatprep.mubr.bf16.mxu0 0
    %202 = vmatmul.mubr.bf16.gmra.mxu0 %v167
    %v203 = vpop.f32.mrf.mxu0
    %v204 = vadd.f32 %v151, %v203
    %v205 = vpop.f32.mrf.mxu0
    %v206 = vpop.f32.mrf.mxu0
    %v207 = vpop.f32.mrf.mxu0
    %208 = vdwg.mxu0
    %v209 = vmax.f32 %v204, 0.0
    %v210 = vpack.c.bf16 %v209, %v209
    %v211 = vld [vmem:[#allocation7] sm:$0xf]
    %v212 = vld [vmem:[#allocation7 + $0x4] sm:$0xf]
    %v213 = vld [vmem:[#allocation7 + $0x8] sm:$0xf]
    %v214 = vld [vmem:[#allocation7 + $0xc] sm:$0xf]
    %v215 = vld [vmem:[%s6] sm:$0x1]
    %v217 = vlaneseq
    %v218 = vshrl.u32 %v217, 7
    %v219 = vsub.s32 0, %v218
    %v220 = vrot.slane %v215, %v219
    %v226 = vunpack.c.l.b16 %v211
    %v227 = vunpack.c.l.b16 %v212
    %v228 = vunpack.c.l.b16 %v213
    %v229 = vunpack.c.l.b16 %v214
    %v230 = vpack.c.b16 %v227, %v226
    %v231 = vpack.c.b16 %v229, %v228
    %v235 = vsel %vm165, %v210, 0
    %237 = vmatprep.subr.bf16.mxu0 0
    %238 = vmatpush1.bf16.msra.mxu0 0
    %239 = vmatprep.subr.bf16.mxu0 0
    %240 = vmatpush1.bf16.msra.mxu0 0
    %241 = vmatprep.subr.bf16.mxu0 0
    %242 = vmatpush1.bf16.msra.mxu0 0
    %243 = vmatprep.subr.bf16.mxu0 0
    %244 = vmatpush1.bf16.msra.mxu0 0
    %245 = vmatprep.subr.bf16.mxu0 0
    %246 = vmatpush1.bf16.msra.mxu0 0
    %247 = vmatprep.subr.bf16.mxu0 0
    %248 = vmatpush1.bf16.msra.mxu0 0
    %249 = vmatprep.subr.bf16.mxu0 0
    %250 = vmatpush1.bf16.msra.mxu0 %v231
    %251 = vmatprep.subr.bf16.mxu0 0
    %252 = vmatpush1.bf16.msra.mxu0 %v230
    %253 = vmatprep.subr.bf16.mxu0 0
    %254 = vmatpush2.bf16.msra.mxu0 0
    %255 = vmatprep.subr.bf16.mxu0 0
    %256 = vmatpush2.bf16.msra.mxu0 0
    %257 = vmatprep.subr.bf16.mxu0 0
    %258 = vmatpush2.bf16.msra.mxu0 0
    %259 = vmatprep.subr.bf16.mxu0 0
    %260 = vmatpush2.bf16.msra.mxu0 0
    %261 = vmatprep.subr.bf16.mxu0 0
    %262 = vmatpush2.bf16.msra.mxu0 0
    %263 = vmatprep.subr.bf16.mxu0 0
    %264 = vmatpush2.bf16.msra.mxu0 0
    %265 = vmatprep.subr.bf16.mxu0 0
    %266 = vmatpush2.bf16.msra.mxu0 0
    %267 = vmatprep.subr.bf16.mxu0 0
    %268 = vmatpush2.bf16.msra.mxu0 0
    %269 = vmatprep.mubr.bf16.mxu0 0
    %270 = vmatmul.mubr.bf16.gmra.mxu0 %v235
    %v271 = vpop.f32.mrf.mxu0
    %v272 = vadd.f32 %v220, %v271
    %v273 = vpop.f32.mrf.mxu0
    %v274 = vpop.f32.mrf.mxu0
    %v275 = vpop.f32.mrf.mxu0
    %276 = vdwg.mxu0
    %vm277 = vcmask 23552
    %278 = vst.msk [vmem:[%s7] sm:$0xff] %vm277, %v272
    // Predicated region
    $region46: #{tpu_custom_call.1} parent=1 // pred_check
      _
    $region47: #{tpu_custom_call.1} parent=1 // pred_check_branch
      %280 = sbr.rel (0) target = $region49
    $region48: #{tpu_custom_call.1} parent=1 // pred_region
      _
    $region49: #{tpu_custom_call.1} parent=1 // pred_fallthru
      _
    // Predicated region
    $region50: #{tpu_custom_call.1} parent=1 // pred_check
      _
    $region51: #{tpu_custom_call.1} parent=1 // pred_check_branch
      %282 = sbr.rel (0) target = $region53
    $region52: #{tpu_custom_call.1} parent=1 // pred_region
      _
    $region53: #{tpu_custom_call.1} parent=1 // pred_fallthru
      _
    %283 = vsyncpa [#allocation3], 1
    %284 = vsyncpa [#allocation5], 1
    %285 = vsyncpa [#allocation8], 1

</llo_original>
